<compile_context>
chip_gen: v5e
topology: v5e:2x2
jax: 0.10.0
libtpu: 0.0.40
codegen_flags: <defaults>
</compile_context>

<pallas_src>
import functools

import jax
import jax.numpy as jnp
from jax import lax
from jax.experimental import pallas as pl
from jax.experimental.pallas import tpu as pltpu


def _round_up(x, m):
    return (x + m - 1) // m * m


def _decbr_kernel(x_ref, w_ref, b_ref, o_ref, xs_ref, *,
                  k, Wp, L_out, cin_p, relu_slope):
    """Fused conv-transpose (as stride-1 conv) + bias + activation, one image.

    x_ref : (1, Cin_p, L_buf)      flattened padded plane, channels on sublanes
    w_ref : (Cout_p, k*k*Cin_p)    tap-stacked weight matrix
    b_ref : (Cout_p, 1)            bias (f32)
    o_ref : (1, Cout_p, L_out)     flattened output over the padded grid
    xs_ref: (k*k*Cin_p, L_out)     VMEM scratch: stacked shifted input slabs
    """
    # Materialize each lane-shifted slab exactly once (static lane offsets),
    # stacked along sublanes so a single matmul consumes all k*k taps.
    for t in range(k * k):
        i, j = t // k, t % k
        shift = i * Wp + j
        xs_ref[t * cin_p:(t + 1) * cin_p, :] = x_ref[0, :, shift:shift + L_out]
    # One deep-contraction matmul on the MXU, f32 accumulation.
    acc = jnp.dot(w_ref[...], xs_ref[...], preferred_element_type=jnp.float32)
    acc = acc + b_ref[...]                                  # lane-broadcast bias
    if relu_slope is not None:
        if relu_slope == 0.0:
            acc = jnp.maximum(acc, 0.0)
        else:
            acc = jnp.where(acc > 0.0, acc, relu_slope * acc)
    o_ref[0, :, :] = acc.astype(o_ref.dtype)


def decbr2d_forward(x, weight, bias, *, stride=1, padding=1, relu=0.0,
                    norm=None, compute_dtype=None):
    """Forward of DECBR2d with default norm=None.

    x:      (N, Cin, H, W)        NCHW (PyTorch convention)
    weight: (Cin, Cout, k, k)     PyTorch ConvTranspose2d weight layout
    bias:   (Cout,) or None
    compute_dtype: optional dtype for the MXU operands (e.g. jnp.bfloat16);
                   accumulation is always f32, output keeps x.dtype.
    """
    assert norm is None  # TODO(synk): bnorm/inorm branches not exercised by module defaults.
    N, Cin, H, W = x.shape
    Cin_w, Cout, kh, kw = weight.shape
    assert Cin == Cin_w and kh == kw
    k, s, p = kh, stride, padding
    pad_amt = k - 1 - p
    # padding > k-1 and output_padding are unsupported (fine for module defaults).
    assert pad_amt >= 0

    H_out = (H - 1) * s - 2 * p + k
    W_out = (W - 1) * s - 2 * p + k
    Hp, Wp = H_out + k - 1, W_out + k - 1

    out_dtype = x.dtype
    cdtype = jnp.dtype(compute_dtype) if compute_dtype is not None else x.dtype

    # conv-transpose == stride-1 conv over the (dilated,) padded input with a
    # flipped kernel.
    # TODO(synk): for stride>1, the s^2-phase sub-pixel decomposition would
    # avoid pushing the dilation zeros through the MXU.
    if s > 1:
        Hd, Wd = (H - 1) * s + 1, (W - 1) * s + 1
        xd = jnp.zeros((N, Cin, Hd, Wd), x.dtype).at[:, :, ::s, ::s].set(x)
    else:
        xd = x

    Cin_p = _round_up(Cin, 8)                 # sublane granule only (no 128 pad)
    Cout_p = _round_up(Cout, 8)
    L_out = _round_up(H_out * Wp, 128)        # lane-dense output length
    max_shift = (k - 1) * Wp + (k - 1)
    L_need = L_out + max_shift
    extra = L_need - Hp * Wp
    extra_rows = -(-extra // Wp) if extra > 0 else 0
    L_buf = (Hp + extra_rows) * Wp            # full-dim block -> no 128 pad needed

    # Single fused pad does channel padding, spatial padding and the tail rows
    # for the flattened-shift reads; the reshape to the flat lane axis is free.
    x_buf = jnp.pad(
        xd.astype(cdtype),
        ((0, 0), (0, Cin_p - Cin),
         (pad_amt, pad_amt + extra_rows), (pad_amt, pad_amt)),
    ).reshape(N, Cin_p, L_buf)

    # Tap-stacked weight matrix, pre-transposed/flipped for the single dot:
    #   w_stk[cout, (i*k+j)*Cin_p + cin] = W_t[cin, cout, k-1-i, k-1-j]
    w_flip = weight[:, :, ::-1, ::-1]                      # (Cin, Cout, k, k)
    w_k = jnp.transpose(w_flip, (1, 2, 3, 0))              # (Cout, k, k, Cin)
    w_stk = jnp.zeros((Cout_p, k, k, Cin_p), cdtype).at[
        :Cout, :, :, :Cin].set(w_k.astype(cdtype))
    w_stk = w_stk.reshape(Cout_p, k * k * Cin_p)

    if bias is None:
        bias = jnp.zeros((Cout,), jnp.float32)
    b_k = jnp.zeros((Cout_p, 1), jnp.float32).at[:Cout, 0].set(
        bias.astype(jnp.float32))

    # Module semantics: activation only if relu is not None and relu >= 0.
    relu_slope = float(relu) if (relu is not None and relu >= 0.0) else None

    kernel = functools.partial(_decbr_kernel, k=k, Wp=Wp, L_out=L_out,
                               cin_p=Cin_p, relu_slope=relu_slope)

    out_buf = pl.pallas_call(
        kernel,
        out_shape=jax.ShapeDtypeStruct((N, Cout_p, L_out), out_dtype),
        grid_spec=pltpu.PrefetchScalarGridSpec(
            num_scalar_prefetch=0,
            grid=(N,),
            in_specs=[
                pl.BlockSpec((1, Cin_p, L_buf), lambda n: (n, 0, 0)),
                pl.BlockSpec((Cout_p, k * k * Cin_p), lambda n: (0, 0)),
                pl.BlockSpec((Cout_p, 1), lambda n: (0, 0)),
            ],
            out_specs=pl.BlockSpec((1, Cout_p, L_out), lambda n: (n, 0, 0)),
            scratch_shapes=[pltpu.VMEM((k * k * Cin_p, L_out), cdtype)],
        ),
        compiler_params=pltpu.CompilerParams(
            dimension_semantics=("parallel",)),
    )(x_buf, w_stk, b_k)

    # Crop the overcomputed padded-grid columns; data is already NCHW-ordered
    # so this is a single fused XLA slice (no transpose).
    # TODO(synk): downstream consumers could take the (Cout, H_out, Wp) layout
    # directly and skip this output-sized pass entirely.
    out = out_buf[:, :Cout, :H_out * Wp].reshape(N, Cout, H_out, Wp)
    return out[:, :, :, :W_out]


def _reference(x, weight, bias, *, stride=1, padding=1, relu=0.0):
    """Pure-JAX reference for ConvTranspose2d + activation (no Pallas)."""
    k = weight.shape[2]
    w_eq = jnp.flip(weight, (2, 3)).transpose(1, 0, 2, 3)   # (Cout, Cin, k, k)
    pad_amt = k - 1 - padding
    y = lax.conv_general_dilated(
        x, w_eq, window_strides=(1, 1),
        padding=[(pad_amt, pad_amt), (pad_amt, pad_amt)],
        lhs_dilation=(stride, stride),
        dimension_numbers=("NCHW", "OIHW", "NCHW"))
    y = y + bias[None, :, None, None]
    if relu == 0.0:
        y = jnp.maximum(y, 0.0)
    else:
        y = jnp.where(y > 0.0, y, relu * y)
    return y


if __name__ == "__main__":
    # DECBR2d(in_channels=4, out_channels=8) with defaults:
    #   kernel_size=3, stride=1, padding=1, bias=True, norm=None, relu=0.0
    N, Cin, Cout, H, W, K = 2, 4, 8, 16, 16, 3

    key = jax.random.PRNGKey(0)
    kx, kw, kb = jax.random.split(key, 3)
    x = jax.random.normal(kx, (N, Cin, H, W), jnp.float32)
    # PyTorch ConvTranspose2d weight shape: (in_channels, out_channels, kH, kW)
    weight = jax.random.normal(kw, (Cin, Cout, K, K), jnp.float32) * 0.1
    bias = jax.random.normal(kb, (Cout,), jnp.float32) * 0.1

    # 1) Default configuration (stride=1, padding=1, ReLU), f32 compute.
    y = decbr2d_forward(x, weight, bias, stride=1, padding=1, relu=0.0)
    y = jax.block_until_ready(y)
    y_ref = _reference(x, weight, bias, stride=1, padding=1, relu=0.0)
    assert y.shape == (N, Cout, H, W), y.shape
    assert jnp.allclose(y, y_ref, atol=1e-4, rtol=1e-4), \
        float(jnp.max(jnp.abs(y - y_ref)))

    # 2) Non-default configuration (stride=2, LeakyReLU(0.2)).
    y2 = decbr2d_forward(x, weight, bias, stride=2, padding=1, relu=0.2)
    y2 = jax.block_until_ready(y2)
    y2_ref = _reference(x, weight, bias, stride=2, padding=1, relu=0.2)
    assert y2.shape == y2_ref.shape, (y2.shape, y2_ref.shape)
    assert jnp.allclose(y2, y2_ref, atol=1e-4, rtol=1e-4), \
        float(jnp.max(jnp.abs(y2 - y2_ref)))

    # 3) bf16 MXU operands (f32 accumulate) — looser tolerance.
    y3 = decbr2d_forward(x, weight, bias, stride=1, padding=1, relu=0.0,
                         compute_dtype=jnp.bfloat16)
    y3 = jax.block_until_ready(y3)
    assert y3.shape == (N, Cout, H, W), y3.shape
    assert jnp.allclose(y3, y_ref, atol=5e-2, rtol=5e-2), \
        float(jnp.max(jnp.abs(y3 - y_ref)))

    print("KERNEL_OK")
</pallas_src>

<mosaic_0001>
module attributes {stable_mosaic.version = 11 : i64} {
  func.func @_decbr_kernel(%arg0: i32, %arg1: memref<1x8x432xf32, #tpu.memory_space<vmem>>, %arg2: memref<8x72xf32, #tpu.memory_space<vmem>>, %arg3: memref<8x1xf32, #tpu.memory_space<vmem>>, %arg4: memref<1x8x384xf32, #tpu.memory_space<vmem>>, %arg5: memref<72x384xf32, #tpu.memory_space<vmem>>) attributes {dimension_semantics = [#tpu.dimension_semantics<parallel>], iteration_bounds = array<i64: 2>, scalar_prefetch = 0 : i64, scratch_operands = 1 : i64, tpu.core_type = #tpu.core_type<tc>, window_params = [{transform_indices = @transform_0, window_bounds = array<i64: 1, 8, 432>}, {pipeline_mode = #tpu.pipeline_mode<synchronous>, transform_indices = @transform_1, window_bounds = array<i64: 8, 72>}, {pipeline_mode = #tpu.pipeline_mode<synchronous>, transform_indices = @transform_2, window_bounds = array<i64: 8, 1>}, {transform_indices = @transform_3, window_bounds = array<i64: 1, 8, 384>}]} {
    %c0 = arith.constant 0 : index
    %c0_0 = arith.constant 0 : index
    %c0_1 = arith.constant 0 : index
    %0 = vector.load %arg1[%c0, %c0_0, %c0_1] : memref<1x8x432xf32, #tpu.memory_space<vmem>>, vector<1x8x384xf32>
    %1 = vector.shape_cast %0 : vector<1x8x384xf32> to vector<8x384xf32>
    %c0_2 = arith.constant 0 : index
    %c0_3 = arith.constant 0 : index
    %2 = vector.load %arg5[%c0_2, %c0_3] : memref<72x384xf32, #tpu.memory_space<vmem>>, vector<8x384xf32>
    tpu.vector_store %arg5[%c0_2, %c0_3], %1 {strides = array<i32>} : memref<72x384xf32, #tpu.memory_space<vmem>>, vector<8x384xf32>,
    %c0_4 = arith.constant 0 : index
    %c0_5 = arith.constant 0 : index
    %c1 = arith.constant 1 : index
    %3 = vector.load %arg1[%c0_4, %c0_5, %c1] : memref<1x8x432xf32, #tpu.memory_space<vmem>>, vector<1x8x384xf32>
    %4 = vector.shape_cast %3 : vector<1x8x384xf32> to vector<8x384xf32>
    %c8 = arith.constant 8 : index
    %c0_6 = arith.constant 0 : index
    %5 = vector.load %arg5[%c8, %c0_6] : memref<72x384xf32, #tpu.memory_space<vmem>>, vector<8x384xf32>
    tpu.vector_store %arg5[%c8, %c0_6], %4 {strides = array<i32>} : memref<72x384xf32, #tpu.memory_space<vmem>>, vector<8x384xf32>,
    %c0_7 = arith.constant 0 : index
    %c0_8 = arith.constant 0 : index
    %c2 = arith.constant 2 : index
    %6 = vector.load %arg1[%c0_7, %c0_8, %c2] : memref<1x8x432xf32, #tpu.memory_space<vmem>>, vector<1x8x384xf32>
    %7 = vector.shape_cast %6 : vector<1x8x384xf32> to vector<8x384xf32>
    %c16 = arith.constant 16 : index
    %c0_9 = arith.constant 0 : index
    %8 = vector.load %arg5[%c16, %c0_9] : memref<72x384xf32, #tpu.memory_space<vmem>>, vector<8x384xf32>
    tpu.vector_store %arg5[%c16, %c0_9], %7 {strides = array<i32>} : memref<72x384xf32, #tpu.memory_space<vmem>>, vector<8x384xf32>,
    %c0_10 = arith.constant 0 : index
    %c0_11 = arith.constant 0 : index
    %c18 = arith.constant 18 : index
    %9 = vector.load %arg1[%c0_10, %c0_11, %c18] : memref<1x8x432xf32, #tpu.memory_space<vmem>>, vector<1x8x384xf32>
    %10 = vector.shape_cast %9 : vector<1x8x384xf32> to vector<8x384xf32>
    %c24 = arith.constant 24 : index
    %c0_12 = arith.constant 0 : index
    %11 = vector.load %arg5[%c24, %c0_12] : memref<72x384xf32, #tpu.memory_space<vmem>>, vector<8x384xf32>
    tpu.vector_store %arg5[%c24, %c0_12], %10 {strides = array<i32>} : memref<72x384xf32, #tpu.memory_space<vmem>>, vector<8x384xf32>,
    %c0_13 = arith.constant 0 : index
    %c0_14 = arith.constant 0 : index
    %c19 = arith.constant 19 : index
    %12 = vector.load %arg1[%c0_13, %c0_14, %c19] : memref<1x8x432xf32, #tpu.memory_space<vmem>>, vector<1x8x384xf32>
    %13 = vector.shape_cast %12 : vector<1x8x384xf32> to vector<8x384xf32>
    %c32 = arith.constant 32 : index
    %c0_15 = arith.constant 0 : index
    %14 = vector.load %arg5[%c32, %c0_15] : memref<72x384xf32, #tpu.memory_space<vmem>>, vector<8x384xf32>
    tpu.vector_store %arg5[%c32, %c0_15], %13 {strides = array<i32>} : memref<72x384xf32, #tpu.memory_space<vmem>>, vector<8x384xf32>,
    %c0_16 = arith.constant 0 : index
    %c0_17 = arith.constant 0 : index
    %c20 = arith.constant 20 : index
    %15 = vector.load %arg1[%c0_16, %c0_17, %c20] : memref<1x8x432xf32, #tpu.memory_space<vmem>>, vector<1x8x384xf32>
    %16 = vector.shape_cast %15 : vector<1x8x384xf32> to vector<8x384xf32>
    %c40 = arith.constant 40 : index
    %c0_18 = arith.constant 0 : index
    %17 = vector.load %arg5[%c40, %c0_18] : memref<72x384xf32, #tpu.memory_space<vmem>>, vector<8x384xf32>
    tpu.vector_store %arg5[%c40, %c0_18], %16 {strides = array<i32>} : memref<72x384xf32, #tpu.memory_space<vmem>>, vector<8x384xf32>,
    %c0_19 = arith.constant 0 : index
    %c0_20 = arith.constant 0 : index
    %c36 = arith.constant 36 : index
    %18 = vector.load %arg1[%c0_19, %c0_20, %c36] : memref<1x8x432xf32, #tpu.memory_space<vmem>>, vector<1x8x384xf32>
    %19 = vector.shape_cast %18 : vector<1x8x384xf32> to vector<8x384xf32>
    %c48 = arith.constant 48 : index
    %c0_21 = arith.constant 0 : index
    %20 = vector.load %arg5[%c48, %c0_21] : memref<72x384xf32, #tpu.memory_space<vmem>>, vector<8x384xf32>
    tpu.vector_store %arg5[%c48, %c0_21], %19 {strides = array<i32>} : memref<72x384xf32, #tpu.memory_space<vmem>>, vector<8x384xf32>,
    %c0_22 = arith.constant 0 : index
    %c0_23 = arith.constant 0 : index
    %c37 = arith.constant 37 : index
    %21 = vector.load %arg1[%c0_22, %c0_23, %c37] : memref<1x8x432xf32, #tpu.memory_space<vmem>>, vector<1x8x384xf32>
    %22 = vector.shape_cast %21 : vector<1x8x384xf32> to vector<8x384xf32>
    %c56 = arith.constant 56 : index
    %c0_24 = arith.constant 0 : index
    %23 = vector.load %arg5[%c56, %c0_24] : memref<72x384xf32, #tpu.memory_space<vmem>>, vector<8x384xf32>
    tpu.vector_store %arg5[%c56, %c0_24], %22 {strides = array<i32>} : memref<72x384xf32, #tpu.memory_space<vmem>>, vector<8x384xf32>,
    %c0_25 = arith.constant 0 : index
    %c0_26 = arith.constant 0 : index
    %c38 = arith.constant 38 : index
    %24 = vector.load %arg1[%c0_25, %c0_26, %c38] : memref<1x8x432xf32, #tpu.memory_space<vmem>>, vector<1x8x384xf32>
    %25 = vector.shape_cast %24 : vector<1x8x384xf32> to vector<8x384xf32>
    %c64 = arith.constant 64 : index
    %c0_27 = arith.constant 0 : index
    %26 = vector.load %arg5[%c64, %c0_27] : memref<72x384xf32, #tpu.memory_space<vmem>>, vector<8x384xf32>
    tpu.vector_store %arg5[%c64, %c0_27], %25 {strides = array<i32>} : memref<72x384xf32, #tpu.memory_space<vmem>>, vector<8x384xf32>,
    %c0_28 = arith.constant 0 : index
    %c0_29 = arith.constant 0 : index
    %27 = vector.load %arg2[%c0_28, %c0_29] : memref<8x72xf32, #tpu.memory_space<vmem>>, vector<8x72xf32>
    %c0_30 = arith.constant 0 : index
    %c0_31 = arith.constant 0 : index
    %28 = vector.load %arg5[%c0_30, %c0_31] : memref<72x384xf32, #tpu.memory_space<vmem>>, vector<72x384xf32>
    %cst = arith.constant dense<0.000000e+00> : vector<8x384xf32>
    %29 = tpu.matmul %27, %28, %cst {dimension_numbers = #tpu.dot_dimension_numbers<[1], [0], [0], [1], [0, 0, 1, 1], [], []>} : vector<8x72xf32>, vector<72x384xf32>, vector<8x384xf32> -> vector<8x384xf32>
    %c0_32 = arith.constant 0 : index
    %c0_33 = arith.constant 0 : index
    %30 = vector.load %arg3[%c0_32, %c0_33] : memref<8x1xf32, #tpu.memory_space<vmem>>, vector<8x1xf32>
    %31 = vector.broadcast %30 : vector<8x1xf32> to vector<8x384xf32>
    %32 = arith.addf %29, %31 : vector<8x384xf32>
    %cst_34 = arith.constant 0.000000e+00 : f32
    %33 = vector.broadcast %cst_34 : f32 to vector<8x384xf32>
    %34 = arith.maximumf %32, %33 : vector<8x384xf32>
    %c0_35 = arith.constant 0 : index
    %c0_36 = arith.constant 0 : index
    %c0_37 = arith.constant 0 : index
    %35 = vector.load %arg4[%c0_35, %c0_36, %c0_37] : memref<1x8x384xf32, #tpu.memory_space<vmem>>, vector<1x8x384xf32>
    %36 = vector.shape_cast %35 : vector<1x8x384xf32> to vector<8x384xf32>
    %37 = vector.shape_cast %34 : vector<8x384xf32> to vector<1x8x384xf32>
    tpu.vector_store %arg4[%c0_35, %c0_36, %c0_37], %37 {strides = array<i32>} : memref<1x8x384xf32, #tpu.memory_space<vmem>>, vector<1x8x384xf32>,
    return
  }
  func.func @transform_0(%arg0: i32) -> (i32, i32, i32) {
    %c0_i32 = arith.constant 0 : i32
    %c0_i32_0 = arith.constant 0 : i32
    %c0_i32_1 = arith.constant 0 : i32
    return %arg0, %c0_i32, %c0_i32_0 : i32, i32, i32
  }
  func.func @transform_1(%arg0: i32) -> (i32, i32) {
    %c0_i32 = arith.constant 0 : i32
    %c0_i32_0 = arith.constant 0 : i32
    %c0_i32_1 = arith.constant 0 : i32
    return %c0_i32, %c0_i32_0 : i32, i32
  }
  func.func @transform_2(%arg0: i32) -> (i32, i32) {
    %c0_i32 = arith.constant 0 : i32
    %c0_i32_0 = arith.constant 0 : i32
    %c0_i32_1 = arith.constant 0 : i32
    return %c0_i32, %c0_i32_0 : i32, i32
  }
  func.func @transform_3(%arg0: i32) -> (i32, i32, i32) {
    %c0_i32 = arith.constant 0 : i32
    %c0_i32_0 = arith.constant 0 : i32
    %c0_i32_1 = arith.constant 0 : i32
    return %arg0, %c0_i32, %c0_i32_0 : i32, i32, i32
  }
}

</mosaic_0001>

<llo_original>
// kernel: tpu_custom_call.1
$region0: #{tpu_custom_call.1}
  #allocation0 [shape = 'u32[]', space=smem, size = 0x4, offset = 0x4, fixed_abs, tag = 'smem constant byte address 0x4 - core index']
  #allocation1 [shape = 'u32[72,128]{1,0:T(1,128)}', space=vmem, size = 0x9000, scoped, tag = 'internal scratch']
  #allocation2 [shape = 'f32[72,384]{1,0:T(8,128)}', space=vmem, size = 0x1b000, scoped, tag = 'scratch operand']
  %s0 = inlined_call_operand.hbm [shape: f32[2,8,432], index: 0, kind: input, shape index: {}]
  %s1 = inlined_call_operand.vmem [shape: f32[8,72], index: 1, kind: input, shape index: {}]
  %s2 = inlined_call_operand.vmem [shape: f32[8,1], index: 2, kind: input, shape index: {}]
  %s3 = inlined_call_operand.hbm [shape: f32[2,8,384], index: 3, kind: output, shape index: {}]
  %s4 = sld [smem:[#allocation0]]
  $region49: #{tpu_custom_call.1} parent=0
    _
  %s6 = ssub.s32 1, %s4
  %s7 = scalar_select 0, %s6, %s4
  $region1: #{tpu_custom_call.1} parent=0
    #allocation3 [shape = 'u8[32768]{0}', space=vmem, size = 0x8000, scoped, tag = 'input window, operand 0']
    #allocation4 [shape = 's32[2]{0}', space=sflag, size = 0x8, scoped, tag = 'scoped memory for tpu_custom_call.1']
    #allocation5 [shape = 's32[2]{0}', space=sflag, size = 0x8, scoped, tag = 'scoped memory for tpu_custom_call.1']
    #allocation6 [shape = 'u8[24576]{0}', space=vmem, size = 0x6000, scoped, tag = 'output window, operand 0']
    %8 = vsyncpa [#allocation4], 0
    %s9 = scalar_lea.sflag [#allocation4], 1
    %10 = vsyncpa %s9, 0
    %11 = vsyncpa [#allocation5], 0
    %s12 = scalar_lea.sflag [#allocation5], 1
    %13 = vsyncpa %s12, 0
    loop: start=0, step=1, limit=4
    $region2: #{tpu_custom_call.1} parent=1 // loop_pre_header
      _
    $region3: #{tpu_custom_call.1} parent=1 // loop_header
      %s15 = sphi 0, %s19
      %p16 = scmp.ge.s32.totalorder %s15, 4
      %s25 = sphi 0, %s27
      %s28 = sphi 0, %s25
      %s29 = sphi 0, %s28
      %s45 = sphi 0, %s29
      %s49 = sphi 0, %s49
      %s51 = sphi 0, %s49
      %s52 = sphi 0, %s51
      %s66 = sphi 0, %s52
      %s70 = sphi 0, %s70
      %s72 = sphi 0, %s70
      %s73 = sphi 0, %s72
      %s87 = sphi 0, %s73
      %s93 = sphi 0, %s95
      %s96 = sphi 0, %s93
      %s97 = sphi 0, %s96
      %s113 = sphi 0, %s97
    $region4: #{tpu_custom_call.1} parent=1 // loop_header_branch
      %18 = sbr.rel (%p16) target = $region8
    $region5: #{tpu_custom_call.1} parent=1 // loop_body
      %s20 = ssub.s32 %s15, 1
      %s21 = ssub.s32 %s15, 2
      %s22 = sadd.s32 %s15, 1
      %s23 = ssub.s32 %s15, %s22
      %p24 = scmp.eq.s32.totalorder %s23, 0
      %s26 = sadd.s32 %s25, 1
      %s27 = scalar_select %p24, %s25, %s26
      %p30 = pneg %p24
      %p31 = scmp.eq.s32.totalorder %s15, 1
      %p32 = por %p30, %p31
      %p33 = scmp.ne.s32.totalorder %s25, %s28
      %p34 = scmp.eq.s32.totalorder %s15, 0
      %p35 = por %p33, %p34
      %p36 = scmp.ne.s32.totalorder %s25, %s28
      %p37 = scmp.eq.s32.totalorder %s20, 1
      %p38 = por %p36, %p37
      %p39 = scmp.ne.s32.totalorder %s28, %s29
      %p40 = scmp.eq.s32.totalorder %s20, 0
      %p41 = por %p39, %p40
      %p42 = scmp.ne.s32.totalorder %s28, %s29
      %p43 = scmp.eq.s32.totalorder %s21, 1
      %p44 = por %p42, %p43
      %p46 = scmp.ne.s32.totalorder %s29, %s45
      %p47 = scmp.eq.s32.totalorder %s21, 0
      %p48 = por %p46, %p47
      %s50 = sadd.s32 %s49, 1
      %p53 = scmp.eq.s32.totalorder %s15, 1
      %p54 = scmp.ne.s32.totalorder %s49, %s51
      %p55 = scmp.eq.s32.totalorder %s15, 0
      %p56 = por %p54, %p55
      %p57 = scmp.ne.s32.totalorder %s49, %s51
      %p58 = scmp.eq.s32.totalorder %s20, 1
      %p59 = por %p57, %p58
      %p60 = scmp.ne.s32.totalorder %s51, %s52
      %p61 = scmp.eq.s32.totalorder %s20, 0
      %p62 = por %p60, %p61
      %p63 = scmp.ne.s32.totalorder %s51, %s52
      %p64 = scmp.eq.s32.totalorder %s21, 1
      %p65 = por %p63, %p64
      %p67 = scmp.ne.s32.totalorder %s52, %s66
      %p68 = scmp.eq.s32.totalorder %s21, 0
      %p69 = por %p67, %p68
      %s71 = sadd.s32 %s70, 1
      %p74 = scmp.eq.s32.totalorder %s15, 1
      %p75 = scmp.ne.s32.totalorder %s70, %s72
      %p76 = scmp.eq.s32.totalorder %s15, 0
      %p77 = por %p75, %p76
      %p78 = scmp.ne.s32.totalorder %s70, %s72
      %p79 = scmp.eq.s32.totalorder %s20, 1
      %p80 = por %p78, %p79
      %p81 = scmp.ne.s32.totalorder %s72, %s73
      %p82 = scmp.eq.s32.totalorder %s20, 0
      %p83 = por %p81, %p82
      %p84 = scmp.ne.s32.totalorder %s72, %s73
      %p85 = scmp.eq.s32.totalorder %s21, 1
      %p86 = por %p84, %p85
      %p88 = scmp.ne.s32.totalorder %s73, %s87
      %p89 = scmp.eq.s32.totalorder %s21, 0
      %p90 = por %p88, %p89
      %s91 = ssub.s32 %s15, %s22
      %p92 = scmp.eq.s32.totalorder %s91, 0
      %s94 = sadd.s32 %s93, 1
      %s95 = scalar_select %p92, %s93, %s94
      %p98 = pneg %p92
      %p99 = scmp.eq.s32.totalorder %s15, 1
      %p100 = por %p98, %p99
      %p101 = scmp.ne.s32.totalorder %s93, %s96
      %p102 = scmp.eq.s32.totalorder %s15, 0
      %p103 = por %p101, %p102
      %p104 = scmp.ne.s32.totalorder %s93, %s96
      %p105 = scmp.eq.s32.totalorder %s20, 1
      %p106 = por %p104, %p105
      %p107 = scmp.ne.s32.totalorder %s96, %s97
      %p108 = scmp.eq.s32.totalorder %s20, 0
      %p109 = por %p107, %p108
      %p110 = scmp.ne.s32.totalorder %s96, %s97
      %p111 = scmp.eq.s32.totalorder %s21, 1
      %p112 = por %p110, %p111
      %p114 = scmp.ne.s32.totalorder %s97, %s113
      %p115 = scmp.eq.s32.totalorder %s21, 0
      %p116 = por %p114, %p115
      %p117 = scmp.le.s32.totalorder 1, %s15
      %p118 = scmp.lt.s32.totalorder %s15, 3
      %p119 = pnand %p117, %p118
      %p120 = pneg %p119
      // Predicated region
      $region9: #{tpu_custom_call.1} parent=5 // pred_check
        _
      $region10: #{tpu_custom_call.1} parent=5 // pred_check_branch
        %122 = sbr.rel (%p119) target = $region12
      $region11: #{tpu_custom_call.1} parent=5 // pred_region
        %s123 = ssub.s32 %s15, 1
        // Predicated region
        $region13: #{tpu_custom_call.1} parent=11 // pred_check
          %p124 = pneg %p62
        $region14: #{tpu_custom_call.1} parent=11 // pred_check_branch
          %126 = sbr.rel (%p124) target = $region16
        $region15: #{tpu_custom_call.1} parent=11 // pred_region
          _
        $region16: #{tpu_custom_call.1} parent=11 // pred_fallthru
          _
        // Predicated region
        $region17: #{tpu_custom_call.1} parent=11 // pred_check
          %p127 = pneg %p83
        $region18: #{tpu_custom_call.1} parent=11 // pred_check_branch
          %129 = sbr.rel (%p127) target = $region20
        $region19: #{tpu_custom_call.1} parent=11 // pred_region
          _
        $region20: #{tpu_custom_call.1} parent=11 // pred_fallthru
          _
      $region12: #{tpu_custom_call.1} parent=5 // pred_fallthru
        _
      %p130 = scmp.lt.s32.totalorder %s15, 2
      // Predicated region
      $region21: #{tpu_custom_call.1} parent=5 // pred_check
        %p131 = pneg %p130
      $region22: #{tpu_custom_call.1} parent=5 // pred_check_branch
        %133 = sbr.rel (%p131) target = $region24
      $region23: #{tpu_custom_call.1} parent=5 // pred_region
        // Predicated region
        $region25: #{tpu_custom_call.1} parent=23 // pred_check
          %p134 = pneg %p35
        $region26: #{tpu_custom_call.1} parent=23 // pred_check_branch
          %136 = sbr.rel (%p134) target = $region28
        $region27: #{tpu_custom_call.1} parent=23 // pred_region
          %s137 = sand.u32 %s25, 1
          %s138 = scalar_lea.sflag [#allocation4], %s137
          %s139 = sand.u32 %s25, 1
          %s140 = smul.addr %s139, 32
          %s141 = scalar_lea.vmem [#allocation3], %s140
          %143 = vsyncadd %s138, 0
          %s144 = smul.addr %s15, 4
          %s145 = smul.addr %s144, 8
          %s146 = scalar_lea.hbm %s0, %s145
          %s148 = sshll.u32 %s146, 4
          %s149 = int_to_ptr.hbm [resolvable:$true] %s148
          %s150 = sshll.u32 %s141, 4
          %s151 = int_to_ptr.vmem [resolvable:$true] %s150
          %153 = dma.hbm_to_vmem [thread:$0]  %s149, 512, %s151, %s138
        $region28: #{tpu_custom_call.1} parent=23 // pred_fallthru
          _
      $region24: #{tpu_custom_call.1} parent=5 // pred_fallthru
        _
      %p154 = scmp.le.s32.totalorder 1, %s15
      %p155 = scmp.lt.s32.totalorder %s15, 3
      %p156 = pnand %p154, %p155
      %p157 = pneg %p156
      // Predicated region
      $region29: #{tpu_custom_call.1} parent=5 // pred_check
        _
      $region30: #{tpu_custom_call.1} parent=5 // pred_check_branch
        %159 = sbr.rel (%p156) target = $region32
      $region31: #{tpu_custom_call.1} parent=5 // pred_region
        %s160 = ssub.s32 %s15, 1
        %s161 = sand.u32 %s28, 1
        %s162 = scalar_lea.sflag [#allocation4], %s161
        %s163 = sand.u32 %s28, 1
        %s164 = smul.addr %s163, 32
        %s165 = scalar_lea.vmem [#allocation3], %s164
        // Predicated region
        $region33: #{tpu_custom_call.1} parent=31 // pred_check
          %p166 = pneg %p41
        $region34: #{tpu_custom_call.1} parent=31 // pred_check_branch
          %168 = sbr.rel (%p166) target = $region36
        $region35: #{tpu_custom_call.1} parent=31 // pred_region
          %170 = dma.done %s162, 512
        $region36: #{tpu_custom_call.1} parent=31 // pred_fallthru
          _
        %s171 = sand.u32 %s28, 1
        %s172 = scalar_lea.sflag [#allocation4], %s171
        %s173 = sand.u32 %s28, 1
        %s174 = smul.addr %s173, 32
        %s175 = scalar_lea.vmem [#allocation3], %s174
        %p176 = pneg %p41
        %p177 = pneg %p38
        %p178 = pneg %p62
        %p179 = pneg %p59
        %p180 = pneg %p83
        %p181 = pneg %p80
        %p182 = pneg %p109
        %p183 = pneg %p106
        %s184 = sand.u32 %s96, 1
        %s185 = scalar_lea.sflag [#allocation5], %s184
        %s186 = sand.u32 %s96, 1
        %s187 = smul.addr %s186, 24
        %s188 = scalar_lea.vmem [#allocation6], %s187
        %v189 = vld [vmem:[%s165] sm:$0xff]
        %v190 = vld [vmem:[%s165 + $0x8] sm:$0xff]
        %v191 = vld [vmem:[%s165 + $0x10] sm:$0xff]
        %192 = vst [vmem:[#allocation2] sm:$0xff] %v189
        %193 = vst [vmem:[#allocation2 + $0x8] sm:$0xff] %v190
        %194 = vst [vmem:[#allocation2 + $0x10] sm:$0xff] %v191
        %v195 = vld [vmem:[%s165] sm:$0xff]
        %v196 = vld [vmem:[%s165 + $0x8] sm:$0xff]
        %v197 = vld [vmem:[%s165 + $0x10] sm:$0xff]
        %v198 = vld [vmem:[%s165 + $0x18] sm:$0xff]
        %203 = vrot.lane.b32.xlu0 %v195, 127
        %v204 = vpop.permute.xlu0 %203
        %205 = vrot.lane.b32.xlu0 %v196, 127
        %v206 = vpop.permute.xlu0 %205
        %207 = vrot.lane.b32.xlu0 %v197, 127
        %v208 = vpop.permute.xlu0 %207
        %209 = vrot.lane.b32.xlu0 %v198, 127
        %v210 = vpop.permute.xlu0 %209
        %vm211 = vcmask 1039360
        %v212 = vsel %vm211, %v204, %v206
        %v213 = vsel %vm211, %v206, %v208
        %v214 = vsel %vm211, %v208, %v210
        %218 = vst [vmem:[#allocation2 + $0x18] sm:$0xff] %v212
        %219 = vst [vmem:[#allocation2 + $0x20] sm:$0xff] %v213
        %220 = vst [vmem:[#allocation2 + $0x28] sm:$0xff] %v214
        %v221 = vld [vmem:[%s165] sm:$0xff]
        %v222 = vld [vmem:[%s165 + $0x8] sm:$0xff]
        %v223 = vld [vmem:[%s165 + $0x10] sm:$0xff]
        %v224 = vld [vmem:[%s165 + $0x18] sm:$0xff]
        %229 = vrot.lane.b32.xlu0 %v221, 126
        %v230 = vpop.permute.xlu0 %229
        %231 = vrot.lane.b32.xlu0 %v222, 126
        %v232 = vpop.permute.xlu0 %231
        %233 = vrot.lane.b32.xlu0 %v223, 126
        %v234 = vpop.permute.xlu0 %233
        %235 = vrot.lane.b32.xlu0 %v224, 126
        %v236 = vpop.permute.xlu0 %235
        %vm237 = vcmask 1031168
        %v238 = vsel %vm237, %v230, %v232
        %v239 = vsel %vm237, %v232, %v234
        %v240 = vsel %vm237, %v234, %v236
        %244 = vst [vmem:[#allocation2 + $0x30] sm:$0xff] %v238
        %245 = vst [vmem:[#allocation2 + $0x38] sm:$0xff] %v239
        %246 = vst [vmem:[#allocation2 + $0x40] sm:$0xff] %v240
        %v247 = vld [vmem:[%s165] sm:$0xff]
        %v248 = vld [vmem:[%s165 + $0x8] sm:$0xff]
        %v249 = vld [vmem:[%s165 + $0x10] sm:$0xff]
        %v250 = vld [vmem:[%s165 + $0x18] sm:$0xff]
        %255 = vrot.lane.b32.xlu0 %v247, 110
        %v256 = vpop.permute.xlu0 %255
        %257 = vrot.lane.b32.xlu0 %v248, 110
        %v258 = vpop.permute.xlu0 %257
        %259 = vrot.lane.b32.xlu0 %v249, 110
        %v260 = vpop.permute.xlu0 %259
        %261 = vrot.lane.b32.xlu0 %v250, 110
        %v262 = vpop.permute.xlu0 %261
        %vm263 = vcmask 900096
        %v264 = vsel %vm263, %v256, %v258
        %v265 = vsel %vm263, %v258, %v260
        %v266 = vsel %vm263, %v260, %v262
        %270 = vst [vmem:[#allocation2 + $0x48] sm:$0xff] %v264
        %271 = vst [vmem:[#allocation2 + $0x50] sm:$0xff] %v265
        %272 = vst [vmem:[#allocation2 + $0x58] sm:$0xff] %v266
        %v273 = vld [vmem:[%s165] sm:$0xff]
        %v274 = vld [vmem:[%s165 + $0x8] sm:$0xff]
        %v275 = vld [vmem:[%s165 + $0x10] sm:$0xff]
        %v276 = vld [vmem:[%s165 + $0x18] sm:$0xff]
        %281 = vrot.lane.b32.xlu0 %v273, 109
        %v282 = vpop.permute.xlu0 %281
        %283 = vrot.lane.b32.xlu0 %v274, 109
        %v284 = vpop.permute.xlu0 %283
        %285 = vrot.lane.b32.xlu0 %v275, 109
        %v286 = vpop.permute.xlu0 %285
        %287 = vrot.lane.b32.xlu0 %v276, 109
        %v288 = vpop.permute.xlu0 %287
        %vm289 = vcmask 891904
        %v290 = vsel %vm289, %v282, %v284
        %v291 = vsel %vm289, %v284, %v286
        %v292 = vsel %vm289, %v286, %v288
        %296 = vst [vmem:[#allocation2 + $0x60] sm:$0xff] %v290
        %297 = vst [vmem:[#allocation2 + $0x68] sm:$0xff] %v291
        %298 = vst [vmem:[#allocation2 + $0x70] sm:$0xff] %v292
        %v299 = vld [vmem:[%s165] sm:$0xff]
        %v300 = vld [vmem:[%s165 + $0x8] sm:$0xff]
        %v301 = vld [vmem:[%s165 + $0x10] sm:$0xff]
        %v302 = vld [vmem:[%s165 + $0x18] sm:$0xff]
        %307 = vrot.lane.b32.xlu0 %v299, 108
        %v308 = vpop.permute.xlu0 %307
        %309 = vrot.lane.b32.xlu0 %v300, 108
        %v310 = vpop.permute.xlu0 %309
        %311 = vrot.lane.b32.xlu0 %v301, 108
        %v312 = vpop.permute.xlu0 %311
        %313 = vrot.lane.b32.xlu0 %v302, 108
        %v314 = vpop.permute.xlu0 %313
        %vm315 = vcmask 883712
        %v316 = vsel %vm315, %v308, %v310
        %v317 = vsel %vm315, %v310, %v312
        %v318 = vsel %vm315, %v312, %v314
        %322 = vst [vmem:[#allocation2 + $0x78] sm:$0xff] %v316
        %323 = vst [vmem:[#allocation2 + $0x80] sm:$0xff] %v317
        %324 = vst [vmem:[#allocation2 + $0x88] sm:$0xff] %v318
        %v325 = vld [vmem:[%s165] sm:$0xff]
        %v326 = vld [vmem:[%s165 + $0x8] sm:$0xff]
        %v327 = vld [vmem:[%s165 + $0x10] sm:$0xff]
        %v328 = vld [vmem:[%s165 + $0x18] sm:$0xff]
        %333 = vrot.lane.b32.xlu0 %v325, 92
        %v334 = vpop.permute.xlu0 %333
        %335 = vrot.lane.b32.xlu0 %v326, 92
        %v336 = vpop.permute.xlu0 %335
        %337 = vrot.lane.b32.xlu0 %v327, 92
        %v338 = vpop.permute.xlu0 %337
        %339 = vrot.lane.b32.xlu0 %v328, 92
        %v340 = vpop.permute.xlu0 %339
        %vm341 = vcmask 752640
        %v342 = vsel %vm341, %v334, %v336
        %v343 = vsel %vm341, %v336, %v338
        %v344 = vsel %vm341, %v338, %v340
        %348 = vst [vmem:[#allocation2 + $0x90] sm:$0xff] %v342
        %349 = vst [vmem:[#allocation2 + $0x98] sm:$0xff] %v343
        %350 = vst [vmem:[#allocation2 + $0xa0] sm:$0xff] %v344
        %v351 = vld [vmem:[%s165] sm:$0xff]
        %v352 = vld [vmem:[%s165 + $0x8] sm:$0xff]
        %v353 = vld [vmem:[%s165 + $0x10] sm:$0xff]
        %v354 = vld [vmem:[%s165 + $0x18] sm:$0xff]
        %359 = vrot.lane.b32.xlu0 %v351, 91
        %v360 = vpop.permute.xlu0 %359
        %361 = vrot.lane.b32.xlu0 %v352, 91
        %v362 = vpop.permute.xlu0 %361
        %363 = vrot.lane.b32.xlu0 %v353, 91
        %v364 = vpop.permute.xlu0 %363
        %365 = vrot.lane.b32.xlu0 %v354, 91
        %v366 = vpop.permute.xlu0 %365
        %vm367 = vcmask 744448
        %v368 = vsel %vm367, %v360, %v362
        %v369 = vsel %vm367, %v362, %v364
        %v370 = vsel %vm367, %v364, %v366
        %374 = vst [vmem:[#allocation2 + $0xa8] sm:$0xff] %v368
        %375 = vst [vmem:[#allocation2 + $0xb0] sm:$0xff] %v369
        %376 = vst [vmem:[#allocation2 + $0xb8] sm:$0xff] %v370
        %v377 = vld [vmem:[%s165] sm:$0xff]
        %v378 = vld [vmem:[%s165 + $0x8] sm:$0xff]
        %v379 = vld [vmem:[%s165 + $0x10] sm:$0xff]
        %v380 = vld [vmem:[%s165 + $0x18] sm:$0xff]
        %385 = vrot.lane.b32.xlu0 %v377, 90
        %v386 = vpop.permute.xlu0 %385
        %387 = vrot.lane.b32.xlu0 %v378, 90
        %v388 = vpop.permute.xlu0 %387
        %389 = vrot.lane.b32.xlu0 %v379, 90
        %v390 = vpop.permute.xlu0 %389
        %391 = vrot.lane.b32.xlu0 %v380, 90
        %v392 = vpop.permute.xlu0 %391
        %vm393 = vcmask 736256
        %v394 = vsel %vm393, %v386, %v388
        %v395 = vsel %vm393, %v388, %v390
        %v396 = vsel %vm393, %v390, %v392
        %400 = vst [vmem:[#allocation2 + $0xc0] sm:$0xff] %v394
        %401 = vst [vmem:[#allocation2 + $0xc8] sm:$0xff] %v395
        %402 = vst [vmem:[#allocation2 + $0xd0] sm:$0xff] %v396
        %v403 = vld [vmem:[%s1] sm:$0xff]
        %v404 = vld [vmem:[#allocation2] sm:$0xff]
        %v405 = vld [vmem:[#allocation2 + $0x8] sm:$0xff]
        %v406 = vld [vmem:[#allocation2 + $0x10] sm:$0xff]
        %v407 = vld [vmem:[#allocation2 + $0x18] sm:$0xff]
        %v408 = vld [vmem:[#allocation2 + $0x20] sm:$0xff]
        %v409 = vld [vmem:[#allocation2 + $0x28] sm:$0xff]
        %v410 = vld [vmem:[#allocation2 + $0x30] sm:$0xff]
        %v411 = vld [vmem:[#allocation2 + $0x38] sm:$0xff]
        %v412 = vld [vmem:[#allocation2 + $0x40] sm:$0xff]
        %v413 = vld [vmem:[#allocation2 + $0x48] sm:$0xff]
        %v414 = vld [vmem:[#allocation2 + $0x50] sm:$0xff]
        %v415 = vld [vmem:[#allocation2 + $0x58] sm:$0xff]
        %v416 = vld [vmem:[#allocation2 + $0x60] sm:$0xff]
        %v417 = vld [vmem:[#allocation2 + $0x68] sm:$0xff]
        %v418 = vld [vmem:[#allocation2 + $0x70] sm:$0xff]
        %v419 = vld [vmem:[#allocation2 + $0x78] sm:$0xff]
        %v420 = vld [vmem:[#allocation2 + $0x80] sm:$0xff]
        %v421 = vld [vmem:[#allocation2 + $0x88] sm:$0xff]
        %v422 = vld [vmem:[#allocation2 + $0x90] sm:$0xff]
        %v423 = vld [vmem:[#allocation2 + $0x98] sm:$0xff]
        %v424 = vld [vmem:[#allocation2 + $0xa0] sm:$0xff]
        %v425 = vld [vmem:[#allocation2 + $0xa8] sm:$0xff]
        %v426 = vld [vmem:[#allocation2 + $0xb0] sm:$0xff]
        %v427 = vld [vmem:[#allocation2 + $0xb8] sm:$0xff]
        %v428 = vld [vmem:[#allocation2 + $0xc0] sm:$0xff]
        %v429 = vld [vmem:[#allocation2 + $0xc8] sm:$0xff]
        %v430 = vld [vmem:[#allocation2 + $0xd0] sm:$0xff]
        %v431 = vld [vmem:[%s2] sm:$0xff]
        %433 = vset.pattern.permute.xlu0 0
        %434 = vperm.xlu0 %433, %v431
        %v435 = vpop.permute.xlu0 %434
        %vm437 = vcmask 588800
        %v439 = vsel %vm437, %v403, 0
        %441 = vmatpush.msra.mxu0 0.0
        %442 = vmatpush.msra.mxu0 0.0
        %443 = vmatpush.msra.mxu0 0.0
        %444 = vmatpush.msra.mxu0 0.0
        %445 = vmatpush.msra.mxu0 0.0
        %446 = vmatpush.msra.mxu0 0.0
        %447 = vmatpush.msra.mxu0 0.0
        %448 = vmatpush.msra.mxu0 %v428
        %449 = vmatpush.msra.mxu0 %v425
        %450 = vmatpush.msra.mxu0 %v422
        %451 = vmatpush.msra.mxu0 %v419
        %452 = vmatpush.msra.mxu0 %v416
        %453 = vmatpush.msra.mxu0 %v413
        %454 = vmatpush.msra.mxu0 %v410
        %455 = vmatpush.msra.mxu0 %v407
        %456 = vmatpush.msra.mxu0 %v404
        %457 = vmatmul.f32.gmra.mxu0 %v439
        %v458 = vpop.f32.mrf.mxu0
        %v459 = vadd.f32 %v435, %v458
        %460 = vdwg.mxu0
        %461 = vmatpush.msra.mxu0 0.0
        %462 = vmatpush.msra.mxu0 0.0
        %463 = vmatpush.msra.mxu0 0.0
        %464 = vmatpush.msra.mxu0 0.0
        %465 = vmatpush.msra.mxu0 0.0
        %466 = vmatpush.msra.mxu0 0.0
        %467 = vmatpush.msra.mxu0 0.0
        %468 = vmatpush.msra.mxu0 %v429
        %469 = vmatpush.msra.mxu0 %v426
        %470 = vmatpush.msra.mxu0 %v423
        %471 = vmatpush.msra.mxu0 %v420
        %472 = vmatpush.msra.mxu0 %v417
        %473 = vmatpush.msra.mxu0 %v414
        %474 = vmatpush.msra.mxu0 %v411
        %475 = vmatpush.msra.mxu0 %v408
        %476 = vmatpush.msra.mxu0 %v405
        %477 = vmatmul.f32.gmra.mxu0 %v439
        %v478 = vpop.f32.mrf.mxu0
        %v479 = vadd.f32 %v435, %v478
        %480 = vdwg.mxu0
        %481 = vmatpush.msra.mxu0 0.0
        %482 = vmatpush.msra.mxu0 0.0
        %483 = vmatpush.msra.mxu0 0.0
        %484 = vmatpush.msra.mxu0 0.0
        %485 = vmatpush.msra.mxu0 0.0
        %486 = vmatpush.msra.mxu0 0.0
        %487 = vmatpush.msra.mxu0 0.0
        %488 = vmatpush.msra.mxu0 %v430
        %489 = vmatpush.msra.mxu0 %v427
        %490 = vmatpush.msra.mxu0 %v424
        %491 = vmatpush.msra.mxu0 %v421
        %492 = vmatpush.msra.mxu0 %v418
        %493 = vmatpush.msra.mxu0 %v415
        %494 = vmatpush.msra.mxu0 %v412
        %495 = vmatpush.msra.mxu0 %v409
        %496 = vmatpush.msra.mxu0 %v406
        %497 = vmatmul.f32.gmra.mxu0 %v439
        %v498 = vpop.f32.mrf.mxu0
        %v499 = vadd.f32 %v435, %v498
        %500 = vdwg.mxu0
        %v501 = vmax.f32 %v459, 0.0
        %v502 = vmax.f32 %v479, 0.0
        %v503 = vmax.f32 %v499, 0.0
        %504 = vst [vmem:[%s188] sm:$0xff] %v501
        %505 = vst [vmem:[%s188 + $0x8] sm:$0xff] %v502
        %506 = vst [vmem:[%s188 + $0x10] sm:$0xff] %v503
        %s507 = sand.u32 %s96, 1
        %s508 = scalar_lea.sflag [#allocation5], %s507
        %s509 = sand.u32 %s96, 1
        %s510 = smul.addr %s509, 24
        %s511 = scalar_lea.vmem [#allocation6], %s510
        // Predicated region
        $region37: #{tpu_custom_call.1} parent=31 // pred_check
          %p512 = pneg %p106
        $region38: #{tpu_custom_call.1} parent=31 // pred_check_branch
          %514 = sbr.rel (%p512) target = $region40
        $region39: #{tpu_custom_call.1} parent=31 // pred_region
          %516 = vsyncadd %s508, 0
          %s517 = smul.addr %s20, 3
          %s518 = smul.addr %s517, 8
          %s519 = scalar_lea.hbm %s3, %s518
          %s521 = sshll.u32 %s511, 4
          %s522 = int_to_ptr.vmem [resolvable:$true] %s521
          %s523 = sshll.u32 %s519, 4
          %s524 = int_to_ptr.hbm [resolvable:$true] %s523
          %526 = dma.vmem_to_hbm [thread:$0]  %s522, 384, %s524, %s508
        $region40: #{tpu_custom_call.1} parent=31 // pred_fallthru
          _
      $region32: #{tpu_custom_call.1} parent=5 // pred_fallthru
        _
      %p527 = scmp.le.s32.totalorder 2, %s15
      // Predicated region
      $region41: #{tpu_custom_call.1} parent=5 // pred_check
        %p528 = pneg %p527
      $region42: #{tpu_custom_call.1} parent=5 // pred_check_branch
        %530 = sbr.rel (%p528) target = $region44
      $region43: #{tpu_custom_call.1} parent=5 // pred_region
        %s531 = ssub.s32 %s15, 2
        // Predicated region
        $region45: #{tpu_custom_call.1} parent=43 // pred_check
          %p532 = pneg %p112
        $region46: #{tpu_custom_call.1} parent=43 // pred_check_branch
          %534 = sbr.rel (%p532) target = $region48
        $region47: #{tpu_custom_call.1} parent=43 // pred_region
          %s535 = sand.u32 %s97, 1
          %s536 = scalar_lea.sflag [#allocation5], %s535
          %s537 = sand.u32 %s97, 1
          %s538 = smul.addr %s537, 24
          %s539 = scalar_lea.vmem [#allocation6], %s538
          %541 = dma.done %s536, 384
        $region48: #{tpu_custom_call.1} parent=43 // pred_fallthru
          _
      $region44: #{tpu_custom_call.1} parent=5 // pred_fallthru
        _
    $region6: #{tpu_custom_call.1} parent=1 // loop_footer
      %s19 = sadd.s32 1, %s15
    $region7: #{tpu_custom_call.1} parent=1 // loop_footer_branch
      %14 = sbr.rel target = $region3
    $region8: #{tpu_custom_call.1} parent=1 // loop_exit
      _
    %542 = vsyncpa [#allocation4], 1
    %s543 = scalar_lea.sflag [#allocation4], 1
    %544 = vsyncpa %s543, 1
    %545 = vsyncpa [#allocation5], 1
    %s546 = scalar_lea.sflag [#allocation5], 1
    %547 = vsyncpa %s546, 1

</llo_original>
